<compile_context>
chip_gen: v7x
topology: tpu7x:2x2x1
jax: 0.10.0
libtpu: 0.0.40
codegen_flags: <defaults>
</compile_context>

<pallas_src>
import jax
import jax.numpy as jnp
from jax.experimental import pallas as pl
from jax.experimental.pallas import tpu as pltpu


def _round_up(v, m):
    return ((v + m - 1) // m) * m


# ----------------------------------------------------------------------------
# Tiled aggregation kernel:  out = [relu](A @ M + b) [@ W]
# Grid axis 0 = row blocks of A ("parallel"); axis 1 = column / contraction
# blocks ("arbitrary", innermost) with a persistent f32 accumulator.
# ----------------------------------------------------------------------------
def _make_agg_kernel(apply_relu, fuse_w):
    if fuse_w:
        def kernel(a_ref, m_ref, b_ref, w_ref, out_ref, acc_ref):
            k = pl.program_id(1)

            @pl.when(k == 0)
            def _():
                acc_ref[...] = jnp.zeros_like(acc_ref)

            acc_ref[...] += jnp.dot(a_ref[...], m_ref[...],
                                    preferred_element_type=jnp.float32)

            @pl.when(k == pl.num_programs(1) - 1)
            def _():
                h = acc_ref[...] + b_ref[...]
                if apply_relu:
                    h = jnp.maximum(h, 0.0)
                out_ref[...] = jnp.dot(
                    h.astype(w_ref.dtype), w_ref[...],
                    preferred_element_type=jnp.float32).astype(out_ref.dtype)
        return kernel

    def kernel(a_ref, m_ref, b_ref, out_ref, acc_ref):
        k = pl.program_id(1)

        @pl.when(k == 0)
        def _():
            acc_ref[...] = jnp.zeros_like(acc_ref)

        acc_ref[...] += jnp.dot(a_ref[...], m_ref[...],
                                preferred_element_type=jnp.float32)

        @pl.when(k == pl.num_programs(1) - 1)
        def _():
            h = acc_ref[...] + b_ref[...]
            if apply_relu:
                h = jnp.maximum(h, 0.0)
            out_ref[...] = h.astype(out_ref.dtype)
    return kernel


def _gcn_aggregate(a, m, b, w=None, *, apply_relu, out_dtype=jnp.float32,
                   tile_m=128, tile_k=128):
    """out = [relu](a @ m + b) [@ w], tiled over the padded N x N adjacency.

    a: [Np, Np] (Np multiple of tile sizes), m: [Np, F], b: [1, F], w: [F, Fo]|None.
    """
    npad = a.shape[0]
    F = m.shape[1]
    fo = F if w is None else w.shape[1]
    tm, tk = tile_m, tile_k
    grid = (npad // tm, npad // tk)

    fuse_w = w is not None
    kernel = _make_agg_kernel(apply_relu, fuse_w)

    in_specs = [
        pl.BlockSpec((tm, tk), lambda i, k: (i, k)),   # A tile (pipelined)
        pl.BlockSpec((tk, F), lambda i, k: (k, 0)),    # M rows matching A cols
        pl.BlockSpec((1, F), lambda i, k: (0, 0)),     # bias (resident)
    ]
    args = [a, m, b]
    if fuse_w:
        in_specs.append(pl.BlockSpec((F, fo), lambda i, k: (0, 0)))  # W (resident)
        args.append(w)

    # Explicit VMEM budget: double-buffered inputs + output block + accumulator.
    a_bytes = jnp.dtype(a.dtype).itemsize
    m_bytes = jnp.dtype(m.dtype).itemsize
    o_bytes = jnp.dtype(out_dtype).itemsize
    vmem_need = (2 * tm * tk * a_bytes + 2 * tk * F * m_bytes
                 + 2 * tm * fo * o_bytes + tm * F * 4 + (1 << 20))
    vmem_limit = int(min(max(2 * vmem_need, 16 << 20), 96 << 20))

    return pl.pallas_call(
        kernel,
        out_shape=jax.ShapeDtypeStruct((npad, fo), out_dtype),
        grid_spec=pltpu.PrefetchScalarGridSpec(
            num_scalar_prefetch=0,
            grid=grid,
            in_specs=in_specs,
            out_specs=pl.BlockSpec((tm, fo), lambda i, k: (i, 0)),
            scratch_shapes=[pltpu.VMEM((tm, F), jnp.float32)],
        ),
        compiler_params=pltpu.CompilerParams(
            dimension_semantics=("parallel", "arbitrary"),
            vmem_limit_bytes=vmem_limit,
        ),
    )(*args)


# ----------------------------------------------------------------------------
# Graph glue (can be hoisted/jitted once if the graph is static across calls).
# ----------------------------------------------------------------------------
def build_normalized_adjacency(edge_index, edge_weight, n, npad, dtype):
    src, dst = edge_index[0], edge_index[1]
    a = jnp.zeros((n, n), jnp.float32).at[dst, src].add(edge_weight)
    a = a.at[jnp.arange(n), jnp.arange(n)].add(1.0)              # add_self_loops
    deg = a.sum(axis=1)
    dinv = jnp.where(deg > 0, 1.0 / jnp.sqrt(deg), 0.0)
    a_norm = dinv[:, None] * a * dinv[None, :]
    a_p = jnp.zeros((npad, npad), jnp.float32).at[:n, :n].set(a_norm)
    return a_p.astype(dtype)


def link_predictor(x, edge_index, edge_weight, edges, params, *,
                   compute_dtype=jnp.float32):
    """x: [N, Fin] f32, edge_index: [2, E] i32, edge_weight: [E] f32,
    edges: [2, Eq] i32.  Returns [Eq] f32 (dot product per query edge)."""
    w1, b1, w2, b2 = params
    N, fin = x.shape

    # Tile / padding choice: lane-aligned (multiple of 128), 512 tiles for big
    # graphs (fits double-buffered in v7x's 64 MiB VMEM; re-derive there).
    tile = 512 if N > 512 else 128
    npad = _round_up(N, tile)

    # TODO(synk): for a static graph, hoist this adjacency build out of the call.
    a_p = build_normalized_adjacency(edge_index, edge_weight, N, npad, compute_dtype)

    x_p = jnp.zeros((npad, fin), jnp.float32).at[:N, :].set(x)
    xw1 = (x_p @ w1).astype(compute_dtype)                        # tiny mix -> XLA

    # layer 1 aggregation + fused layer-2 feature mix: hw2 = relu(A@xw1 + b1) @ W2
    hw2 = _gcn_aggregate(a_p, xw1, b1[None, :].astype(jnp.float32),
                         w2.astype(compute_dtype),
                         apply_relu=True, out_dtype=compute_dtype,
                         tile_m=tile, tile_k=tile)                # [npad, 32]

    # layer 2 aggregation: h2 = A@hw2 + b2
    h2 = _gcn_aggregate(a_p, hw2, b2[None, :].astype(jnp.float32), None,
                        apply_relu=False, out_dtype=jnp.float32,
                        tile_m=tile, tile_k=tile)                 # [npad, 32]

    # Edge gather + rowwise dot: index-based gather in XLA (no one-hot matmuls).
    h2 = h2[:N]
    ei = jnp.take(h2, edges[0], axis=0)
    ej = jnp.take(h2, edges[1], axis=0)
    return jnp.sum(ei * ej, axis=-1)


def reference(x, edge_index, edge_weight, edges, params):
    w1, b1, w2, b2 = params
    N = x.shape[0]
    src, dst = edge_index[0], edge_index[1]
    a = jnp.zeros((N, N), jnp.float32).at[dst, src].add(edge_weight)
    a = a.at[jnp.arange(N), jnp.arange(N)].add(1.0)
    deg = a.sum(axis=1)
    dinv = jnp.where(deg > 0, 1.0 / jnp.sqrt(deg), 0.0)
    a_norm = dinv[:, None] * a * dinv[None, :]
    h1 = jnp.maximum(a_norm @ (x @ w1) + b1, 0.0)
    h2 = a_norm @ (h1 @ w2) + b2
    return (h2[edges[0]] * h2[edges[1]]).sum(-1)


if __name__ == "__main__":
    key = jax.random.PRNGKey(0)
    k1, k2, k3, k4, k5 = jax.random.split(key, 5)

    # test data from the PyTorch test file (edge_index given as [E, 2] -> transpose)
    edge_index = jnp.array(
        [[0, 1], [1, 0], [1, 2], [2, 1], [3, 4],
         [4, 3], [1, 3], [3, 1], [0, 5], [5, 0]], dtype=jnp.int32).T   # [2, 10]
    x = jnp.array([[-1.0], [0.0], [1.0], [-1.0], [0.0], [1.0]], dtype=jnp.float32)

    edge_weight = jax.random.uniform(k5, (edge_index.shape[1],),
                                     minval=0.5, maxval=1.5, dtype=jnp.float32)
    edges = edge_index  # predict on the same edges

    # deterministic parameters: GCN(in=1, hidden=16, num_layers=2, out=32)
    fin, hidden, fout = 1, 16, 32
    w1 = jax.random.normal(k1, (fin, hidden), jnp.float32) * 0.5
    b1 = jax.random.normal(k2, (hidden,), jnp.float32) * 0.1
    w2 = jax.random.normal(k3, (hidden, fout), jnp.float32) * 0.5
    b2 = jax.random.normal(k4, (fout,), jnp.float32) * 0.1
    params = (w1, b1, w2, b2)

    ref = reference(x, edge_index, edge_weight, edges, params)

    # f32 path (exact semantics)
    out = link_predictor(x, edge_index, edge_weight, edges, params)
    out = jax.block_until_ready(out)
    assert out.shape == (edge_index.shape[1],)
    assert jnp.allclose(out, ref, atol=1e-4, rtol=1e-4), (out, ref)

    # bf16 adjacency/operand path (v6e/v7x byte-saving option), looser tolerance
    out_bf16 = jax.block_until_ready(
        link_predictor(x, edge_index, edge_weight, edges, params,
                       compute_dtype=jnp.bfloat16))
    assert jnp.allclose(out_bf16, ref, atol=5e-2, rtol=5e-2), (out_bf16, ref)

    print("KERNEL_OK")
</pallas_src>

<mosaic_0001>
module attributes {stable_mosaic.version = 11 : i64} {
  func.func @kernel(%arg0: i32, %arg1: i32, %arg2: memref<128x128xf32, #tpu.memory_space<vmem>>, %arg3: memref<128x16xf32, #tpu.memory_space<vmem>>, %arg4: memref<1x16xf32, #tpu.memory_space<vmem>>, %arg5: memref<16x32xf32, #tpu.memory_space<vmem>>, %arg6: memref<128x32xf32, #tpu.memory_space<vmem>>, %arg7: memref<128x16xf32, #tpu.memory_space<vmem>>) attributes {dimension_semantics = [#tpu.dimension_semantics<parallel>, #tpu.dimension_semantics<arbitrary>], iteration_bounds = array<i64: 1, 1>, scalar_prefetch = 0 : i64, scratch_operands = 1 : i64, tpu.core_type = #tpu.core_type<tc>, window_params = [{transform_indices = @transform_0, window_bounds = array<i64: 128, 128>}, {transform_indices = @transform_1, window_bounds = array<i64: 128, 16>}, {pipeline_mode = #tpu.pipeline_mode<synchronous>, transform_indices = @transform_2, window_bounds = array<i64: 1, 16>}, {pipeline_mode = #tpu.pipeline_mode<synchronous>, transform_indices = @transform_3, window_bounds = array<i64: 16, 32>}, {transform_indices = @transform_4, window_bounds = array<i64: 128, 32>}]} {
    %c0_i32 = arith.constant 0 : i32
    %0 = arith.cmpi eq, %arg1, %c0_i32 : i32
    %1 = arith.extui %0 : i1 to i32
    %c0_i32_0 = arith.constant 0 : i32
    %2 = arith.cmpi ne, %1, %c0_i32_0 : i32
    scf.if %2 {
      %cst_10 = arith.constant 0.000000e+00 : f32
      %12 = vector.broadcast %cst_10 : f32 to vector<128x16xf32>
      %c0_11 = arith.constant 0 : index
      %c0_12 = arith.constant 0 : index
      %13 = vector.load %arg7[%c0_11, %c0_12] : memref<128x16xf32, #tpu.memory_space<vmem>>, vector<128x16xf32>
      tpu.vector_store %arg7[%c0_11, %c0_12], %12 {strides = array<i32>} : memref<128x16xf32, #tpu.memory_space<vmem>>, vector<128x16xf32>,
    } else {
    }
    %c0 = arith.constant 0 : index
    %c0_1 = arith.constant 0 : index
    %3 = vector.load %arg7[%c0, %c0_1] : memref<128x16xf32, #tpu.memory_space<vmem>>, vector<128x16xf32>
    %c0_2 = arith.constant 0 : index
    %c0_3 = arith.constant 0 : index
    %4 = vector.load %arg2[%c0_2, %c0_3] : memref<128x128xf32, #tpu.memory_space<vmem>>, vector<128x128xf32>
    %c0_4 = arith.constant 0 : index
    %c0_5 = arith.constant 0 : index
    %5 = vector.load %arg3[%c0_4, %c0_5] : memref<128x16xf32, #tpu.memory_space<vmem>>, vector<128x16xf32>
    %cst = arith.constant dense<0.000000e+00> : vector<128x16xf32>
    %6 = tpu.matmul %4, %5, %cst {dimension_numbers = #tpu.dot_dimension_numbers<[1], [0], [0], [1], [0, 0, 1, 1], [], []>} : vector<128x128xf32>, vector<128x16xf32>, vector<128x16xf32> -> vector<128x16xf32>
    %7 = arith.addf %3, %6 : vector<128x16xf32>
    %c0_6 = arith.constant 0 : index
    %c0_7 = arith.constant 0 : index
    %8 = vector.load %arg7[%c0_6, %c0_7] : memref<128x16xf32, #tpu.memory_space<vmem>>, vector<128x16xf32>
    tpu.vector_store %arg7[%c0_6, %c0_7], %7 {strides = array<i32>} : memref<128x16xf32, #tpu.memory_space<vmem>>, vector<128x16xf32>,
    %c0_i32_8 = arith.constant 0 : i32
    %9 = arith.cmpi eq, %arg1, %c0_i32_8 : i32
    %10 = arith.extui %9 : i1 to i32
    %c0_i32_9 = arith.constant 0 : i32
    %11 = arith.cmpi ne, %10, %c0_i32_9 : i32
    scf.if %11 {
      %c0_10 = arith.constant 0 : index
      %c0_11 = arith.constant 0 : index
      %12 = vector.load %arg7[%c0_10, %c0_11] : memref<128x16xf32, #tpu.memory_space<vmem>>, vector<128x16xf32>
      %c0_12 = arith.constant 0 : index
      %c0_13 = arith.constant 0 : index
      %13 = vector.load %arg4[%c0_12, %c0_13] : memref<1x16xf32, #tpu.memory_space<vmem>>, vector<1x16xf32>
      %14 = vector.broadcast %13 : vector<1x16xf32> to vector<128x16xf32>
      %15 = arith.addf %12, %14 : vector<128x16xf32>
      %cst_14 = arith.constant 0.000000e+00 : f32
      %16 = vector.broadcast %cst_14 : f32 to vector<128x16xf32>
      %17 = arith.maximumf %15, %16 : vector<128x16xf32>
      %c0_15 = arith.constant 0 : index
      %c0_16 = arith.constant 0 : index
      %18 = vector.load %arg5[%c0_15, %c0_16] : memref<16x32xf32, #tpu.memory_space<vmem>>, vector<16x32xf32>
      %cst_17 = arith.constant dense<0.000000e+00> : vector<128x32xf32>
      %19 = tpu.matmul %17, %18, %cst_17 {dimension_numbers = #tpu.dot_dimension_numbers<[1], [0], [0], [1], [0, 0, 1, 1], [], []>} : vector<128x16xf32>, vector<16x32xf32>, vector<128x32xf32> -> vector<128x32xf32>
      %c0_18 = arith.constant 0 : index
      %c0_19 = arith.constant 0 : index
      %20 = vector.load %arg6[%c0_18, %c0_19] : memref<128x32xf32, #tpu.memory_space<vmem>>, vector<128x32xf32>
      tpu.vector_store %arg6[%c0_18, %c0_19], %19 {strides = array<i32>} : memref<128x32xf32, #tpu.memory_space<vmem>>, vector<128x32xf32>,
    } else {
    }
    return
  }
  func.func @transform_0(%arg0: i32, %arg1: i32) -> (i32, i32) {
    %c0_i32 = arith.constant 0 : i32
    return %arg0, %arg1 : i32, i32
  }
  func.func @transform_1(%arg0: i32, %arg1: i32) -> (i32, i32) {
    %c0_i32 = arith.constant 0 : i32
    %c0_i32_0 = arith.constant 0 : i32
    return %arg1, %c0_i32 : i32, i32
  }
  func.func @transform_2(%arg0: i32, %arg1: i32) -> (i32, i32) {
    %c0_i32 = arith.constant 0 : i32
    %c0_i32_0 = arith.constant 0 : i32
    %c0_i32_1 = arith.constant 0 : i32
    return %c0_i32, %c0_i32_0 : i32, i32
  }
  func.func @transform_3(%arg0: i32, %arg1: i32) -> (i32, i32) {
    %c0_i32 = arith.constant 0 : i32
    %c0_i32_0 = arith.constant 0 : i32
    %c0_i32_1 = arith.constant 0 : i32
    return %c0_i32, %c0_i32_0 : i32, i32
  }
  func.func @transform_4(%arg0: i32, %arg1: i32) -> (i32, i32) {
    %c0_i32 = arith.constant 0 : i32
    %c0_i32_0 = arith.constant 0 : i32
    return %arg0, %c0_i32 : i32, i32
  }
}

</mosaic_0001>

<llo_original>
// kernel: tpu_custom_call.1
$region0: #{tpu_custom_call.1}
  #allocation0 [shape = 'u32[]', space=smem, size = 0x4, offset = 0x4, fixed_abs, tag = 'smem constant byte address 0x4 - core index']
  #allocation1 [shape = 'u32[144,128]{1,0:T(1,128)}', space=vmem, size = 0x12000, scoped, tag = 'internal scratch']
  #allocation2 [shape = 'f32[128,16]{1,0:T(8,128)}', space=vmem, size = 0x10000, scoped, tag = 'scratch operand']
  %s0 = inlined_call_operand.vmem [shape: f32[128,128], index: 0, kind: input, shape index: {}]
  %s1 = inlined_call_operand.vmem [shape: f32[128,16], index: 1, kind: input, shape index: {}]
  %s2 = inlined_call_operand.vmem [shape: f32[1,16], index: 2, kind: input, shape index: {}]
  %s3 = inlined_call_operand.vmem [shape: f32[16,32], index: 3, kind: input, shape index: {}]
  %s4 = inlined_call_operand.vmem [shape: f32[128,32], index: 4, kind: output, shape index: {}]
  %s5 = sld [smem:[#allocation0]]
  $region34: #{tpu_custom_call.1} parent=0
    _
  %s7 = ssub.s32 1, %s5
  %s8 = scalar_select 0, %s7, %s5
  // Predicated region
  $region2: #{tpu_custom_call.1} parent=0 // pred_check
    _
  $region3: #{tpu_custom_call.1} parent=0 // pred_check_branch
    %10 = sbr.rel (0) target = $region5
  $region4: #{tpu_custom_call.1} parent=0 // pred_region
    _
  $region5: #{tpu_custom_call.1} parent=0 // pred_fallthru
    _
  // Predicated region
  $region6: #{tpu_custom_call.1} parent=0 // pred_check
    _
  $region7: #{tpu_custom_call.1} parent=0 // pred_check_branch
    %12 = sbr.rel (0) target = $region9
  $region8: #{tpu_custom_call.1} parent=0 // pred_region
    _
  $region9: #{tpu_custom_call.1} parent=0 // pred_fallthru
    _
  // Predicated region
  $region10: #{tpu_custom_call.1} parent=0 // pred_check
    _
  $region11: #{tpu_custom_call.1} parent=0 // pred_check_branch
    %14 = sbr.rel (0) target = $region13
  $region12: #{tpu_custom_call.1} parent=0 // pred_region
    _
  $region13: #{tpu_custom_call.1} parent=0 // pred_fallthru
    _
  // Predicated region
  $region14: #{tpu_custom_call.1} parent=0 // pred_check
    _
  $region15: #{tpu_custom_call.1} parent=0 // pred_check_branch
    %16 = sbr.rel (0) target = $region17
  $region16: #{tpu_custom_call.1} parent=0 // pred_region
    _
  $region17: #{tpu_custom_call.1} parent=0 // pred_fallthru
    _
  %p17 = scmp.eq.s32.totalorder 0, 0
  // Predicated region
  $region18: #{tpu_custom_call.1} parent=0 // pred_check
    %p18 = pneg %p17
  $region19: #{tpu_custom_call.1} parent=0 // pred_check_branch
    %20 = sbr.rel (%p18) target = $region21
  $region20: #{tpu_custom_call.1} parent=0 // pred_region
    %vm21 = vcmask 130048
    %22 = vst.msk [vmem:[#allocation2] sm:$0xff] %vm21, 0.0
    %23 = vst.msk [vmem:[#allocation2 + $0x8] sm:$0xff] %vm21, 0.0
    %24 = vst.msk [vmem:[#allocation2 + $0x10] sm:$0xff] %vm21, 0.0
    %25 = vst.msk [vmem:[#allocation2 + $0x18] sm:$0xff] %vm21, 0.0
    %26 = vst.msk [vmem:[#allocation2 + $0x20] sm:$0xff] %vm21, 0.0
    %27 = vst.msk [vmem:[#allocation2 + $0x28] sm:$0xff] %vm21, 0.0
    %28 = vst.msk [vmem:[#allocation2 + $0x30] sm:$0xff] %vm21, 0.0
    %29 = vst.msk [vmem:[#allocation2 + $0x38] sm:$0xff] %vm21, 0.0
    %30 = vst.msk [vmem:[#allocation2 + $0x40] sm:$0xff] %vm21, 0.0
    %31 = vst.msk [vmem:[#allocation2 + $0x48] sm:$0xff] %vm21, 0.0
    %32 = vst.msk [vmem:[#allocation2 + $0x50] sm:$0xff] %vm21, 0.0
    %33 = vst.msk [vmem:[#allocation2 + $0x58] sm:$0xff] %vm21, 0.0
    %34 = vst.msk [vmem:[#allocation2 + $0x60] sm:$0xff] %vm21, 0.0
    %35 = vst.msk [vmem:[#allocation2 + $0x68] sm:$0xff] %vm21, 0.0
    %36 = vst.msk [vmem:[#allocation2 + $0x70] sm:$0xff] %vm21, 0.0
    %37 = vst.msk [vmem:[#allocation2 + $0x78] sm:$0xff] %vm21, 0.0
  $region21: #{tpu_custom_call.1} parent=0 // pred_fallthru
    _
  %v38 = vld [vmem:[#allocation2] sm:$0xff]
  %v39 = vld [vmem:[#allocation2 + $0x8] sm:$0xff]
  %v40 = vld [vmem:[#allocation2 + $0x10] sm:$0xff]
  %v41 = vld [vmem:[#allocation2 + $0x18] sm:$0xff]
  %v42 = vld [vmem:[#allocation2 + $0x20] sm:$0xff]
  %v43 = vld [vmem:[#allocation2 + $0x28] sm:$0xff]
  %v44 = vld [vmem:[#allocation2 + $0x30] sm:$0xff]
  %v45 = vld [vmem:[#allocation2 + $0x38] sm:$0xff]
  %v46 = vld [vmem:[#allocation2 + $0x40] sm:$0xff]
  %v47 = vld [vmem:[#allocation2 + $0x48] sm:$0xff]
  %v48 = vld [vmem:[#allocation2 + $0x50] sm:$0xff]
  %v49 = vld [vmem:[#allocation2 + $0x58] sm:$0xff]
  %v50 = vld [vmem:[#allocation2 + $0x60] sm:$0xff]
  %v51 = vld [vmem:[#allocation2 + $0x68] sm:$0xff]
  %v52 = vld [vmem:[#allocation2 + $0x70] sm:$0xff]
  %v53 = vld [vmem:[#allocation2 + $0x78] sm:$0xff]
  %v54 = vld [vmem:[%s0] sm:$0xff]
  %v55 = vld [vmem:[%s0 + $0x8] sm:$0xff]
  %v56 = vld [vmem:[%s0 + $0x10] sm:$0xff]
  %v57 = vld [vmem:[%s0 + $0x18] sm:$0xff]
  %v58 = vld [vmem:[%s0 + $0x20] sm:$0xff]
  %v59 = vld [vmem:[%s0 + $0x28] sm:$0xff]
  %v60 = vld [vmem:[%s0 + $0x30] sm:$0xff]
  %v61 = vld [vmem:[%s0 + $0x38] sm:$0xff]
  %v62 = vld [vmem:[%s0 + $0x40] sm:$0xff]
  %v63 = vld [vmem:[%s0 + $0x48] sm:$0xff]
  %v64 = vld [vmem:[%s0 + $0x50] sm:$0xff]
  %v65 = vld [vmem:[%s0 + $0x58] sm:$0xff]
  %v66 = vld [vmem:[%s0 + $0x60] sm:$0xff]
  %v67 = vld [vmem:[%s0 + $0x68] sm:$0xff]
  %v68 = vld [vmem:[%s0 + $0x70] sm:$0xff]
  %v69 = vld [vmem:[%s0 + $0x78] sm:$0xff]
  %v70 = vld [vmem:[%s1] sm:$0xff]
  %v71 = vld [vmem:[%s1 + $0x8] sm:$0xff]
  %v72 = vld [vmem:[%s1 + $0x10] sm:$0xff]
  %v73 = vld [vmem:[%s1 + $0x18] sm:$0xff]
  %v74 = vld [vmem:[%s1 + $0x20] sm:$0xff]
  %v75 = vld [vmem:[%s1 + $0x28] sm:$0xff]
  %v76 = vld [vmem:[%s1 + $0x30] sm:$0xff]
  %v77 = vld [vmem:[%s1 + $0x38] sm:$0xff]
  %v78 = vld [vmem:[%s1 + $0x40] sm:$0xff]
  %v79 = vld [vmem:[%s1 + $0x48] sm:$0xff]
  %v80 = vld [vmem:[%s1 + $0x50] sm:$0xff]
  %v81 = vld [vmem:[%s1 + $0x58] sm:$0xff]
  %v82 = vld [vmem:[%s1 + $0x60] sm:$0xff]
  %v83 = vld [vmem:[%s1 + $0x68] sm:$0xff]
  %v84 = vld [vmem:[%s1 + $0x70] sm:$0xff]
  %v85 = vld [vmem:[%s1 + $0x78] sm:$0xff]
  %86 = vmatprep.subr.mxu0 0.0
  %87 = vmatpush1.msra.mxu0 %v70
  %88 = vmatprep.subr.mxu0 0.0
  %89 = vmatpush1.msra.mxu0 %v71
  %90 = vmatprep.subr.mxu0 0.0
  %91 = vmatpush1.msra.mxu0 %v72
  %92 = vmatprep.subr.mxu0 0.0
  %93 = vmatpush1.msra.mxu0 %v73
  %94 = vmatprep.subr.mxu0 0.0
  %95 = vmatpush1.msra.mxu0 %v74
  %96 = vmatprep.subr.mxu0 0.0
  %97 = vmatpush1.msra.mxu0 %v75
  %98 = vmatprep.subr.mxu0 0.0
  %99 = vmatpush1.msra.mxu0 %v76
  %100 = vmatprep.subr.mxu0 0.0
  %101 = vmatpush1.msra.mxu0 %v77
  %102 = vmatprep.subr.mxu0 0.0
  %103 = vmatpush1.msra.mxu0 %v78
  %104 = vmatprep.subr.mxu0 0.0
  %105 = vmatpush1.msra.mxu0 %v79
  %106 = vmatprep.subr.mxu0 0.0
  %107 = vmatpush1.msra.mxu0 %v80
  %108 = vmatprep.subr.mxu0 0.0
  %109 = vmatpush1.msra.mxu0 %v81
  %110 = vmatprep.subr.mxu0 0.0
  %111 = vmatpush1.msra.mxu0 %v82
  %112 = vmatprep.subr.mxu0 0.0
  %113 = vmatpush1.msra.mxu0 %v83
  %114 = vmatprep.subr.mxu0 0.0
  %115 = vmatpush1.msra.mxu0 %v84
  %116 = vmatprep.subr.mxu0 0.0
  %117 = vmatpush1.msra.mxu0 %v85
  %118 = vmatprep.subr.mxu0 0.0
  %119 = vmatpush1.msra.mxu0 0.0
  %120 = vmatprep.subr.mxu0 0.0
  %121 = vmatpush1.msra.mxu0 0.0
  %122 = vmatprep.subr.mxu0 0.0
  %123 = vmatpush1.msra.mxu0 0.0
  %124 = vmatprep.subr.mxu0 0.0
  %125 = vmatpush1.msra.mxu0 0.0
  %126 = vmatprep.subr.mxu0 0.0
  %127 = vmatpush1.msra.mxu0 0.0
  %128 = vmatprep.subr.mxu0 0.0
  %129 = vmatpush1.msra.mxu0 0.0
  %130 = vmatprep.subr.mxu0 0.0
  %131 = vmatpush1.msra.mxu0 0.0
  %132 = vmatprep.subr.mxu0 0.0
  %133 = vmatpush1.msra.mxu0 0.0
  %134 = vmatprep.subr.mxu0 0.0
  %135 = vmatpush1.msra.mxu0 0.0
  %136 = vmatprep.subr.mxu0 0.0
  %137 = vmatpush1.msra.mxu0 0.0
  %138 = vmatprep.subr.mxu0 0.0
  %139 = vmatpush1.msra.mxu0 0.0
  %140 = vmatprep.subr.mxu0 0.0
  %141 = vmatpush1.msra.mxu0 0.0
  %142 = vmatprep.subr.mxu0 0.0
  %143 = vmatpush1.msra.mxu0 0.0
  %144 = vmatprep.subr.mxu0 0.0
  %145 = vmatpush1.msra.mxu0 0.0
  %146 = vmatprep.subr.mxu0 0.0
  %147 = vmatpush1.msra.mxu0 0.0
  %148 = vmatprep.subr.mxu0 0.0
  %149 = vmatpush1.msra.mxu0 0.0
  %150 = vmatprep.mubr.f32.mxu0 0.0
  %151 = vmatmul.mubr.f32.gmra.mrb[0].mxu0 %v54
  %v152 = vpop.f32.mrb[0].mxu0
  %v153 = vadd.f32 0.0, %v152
  %v154 = vpop.f32.mrb[0].mxu0
  %155 = vmatprep.mubr.f32.mxu0 0.0
  %156 = vmatmul.mubr.f32.gmra.mrb[0].mxu0 %v55
  %v157 = vpop.f32.mrb[0].mxu0
  %v158 = vadd.f32 0.0, %v157
  %v159 = vpop.f32.mrb[0].mxu0
  %160 = vmatprep.mubr.f32.mxu0 0.0
  %161 = vmatmul.mubr.f32.gmra.mrb[0].mxu0 %v56
  %v162 = vpop.f32.mrb[0].mxu0
  %v163 = vadd.f32 0.0, %v162
  %v164 = vpop.f32.mrb[0].mxu0
  %165 = vmatprep.mubr.f32.mxu0 0.0
  %166 = vmatmul.mubr.f32.gmra.mrb[0].mxu0 %v57
  %v167 = vpop.f32.mrb[0].mxu0
  %v168 = vadd.f32 0.0, %v167
  %v169 = vpop.f32.mrb[0].mxu0
  %170 = vmatprep.mubr.f32.mxu0 0.0
  %171 = vmatmul.mubr.f32.gmra.mrb[0].mxu0 %v58
  %v172 = vpop.f32.mrb[0].mxu0
  %v173 = vadd.f32 0.0, %v172
  %v174 = vpop.f32.mrb[0].mxu0
  %175 = vmatprep.mubr.f32.mxu0 0.0
  %176 = vmatmul.mubr.f32.gmra.mrb[0].mxu0 %v59
  %v177 = vpop.f32.mrb[0].mxu0
  %v178 = vadd.f32 0.0, %v177
  %v179 = vpop.f32.mrb[0].mxu0
  %180 = vmatprep.mubr.f32.mxu0 0.0
  %181 = vmatmul.mubr.f32.gmra.mrb[0].mxu0 %v60
  %v182 = vpop.f32.mrb[0].mxu0
  %v183 = vadd.f32 0.0, %v182
  %v184 = vpop.f32.mrb[0].mxu0
  %185 = vmatprep.mubr.f32.mxu0 0.0
  %186 = vmatmul.mubr.f32.gmra.mrb[0].mxu0 %v61
  %v187 = vpop.f32.mrb[0].mxu0
  %v188 = vadd.f32 0.0, %v187
  %v189 = vpop.f32.mrb[0].mxu0
  %190 = vmatprep.mubr.f32.mxu0 0.0
  %191 = vmatmul.mubr.f32.gmra.mrb[0].mxu0 %v62
  %v192 = vpop.f32.mrb[0].mxu0
  %v193 = vadd.f32 0.0, %v192
  %v194 = vpop.f32.mrb[0].mxu0
  %195 = vmatprep.mubr.f32.mxu0 0.0
  %196 = vmatmul.mubr.f32.gmra.mrb[0].mxu0 %v63
  %v197 = vpop.f32.mrb[0].mxu0
  %v198 = vadd.f32 0.0, %v197
  %v199 = vpop.f32.mrb[0].mxu0
  %200 = vmatprep.mubr.f32.mxu0 0.0
  %201 = vmatmul.mubr.f32.gmra.mrb[0].mxu0 %v64
  %v202 = vpop.f32.mrb[0].mxu0
  %v203 = vadd.f32 0.0, %v202
  %v204 = vpop.f32.mrb[0].mxu0
  %205 = vmatprep.mubr.f32.mxu0 0.0
  %206 = vmatmul.mubr.f32.gmra.mrb[0].mxu0 %v65
  %v207 = vpop.f32.mrb[0].mxu0
  %v208 = vadd.f32 0.0, %v207
  %v209 = vpop.f32.mrb[0].mxu0
  %210 = vmatprep.mubr.f32.mxu0 0.0
  %211 = vmatmul.mubr.f32.gmra.mrb[0].mxu0 %v66
  %v212 = vpop.f32.mrb[0].mxu0
  %v213 = vadd.f32 0.0, %v212
  %v214 = vpop.f32.mrb[0].mxu0
  %215 = vmatprep.mubr.f32.mxu0 0.0
  %216 = vmatmul.mubr.f32.gmra.mrb[0].mxu0 %v67
  %v217 = vpop.f32.mrb[0].mxu0
  %v218 = vadd.f32 0.0, %v217
  %v219 = vpop.f32.mrb[0].mxu0
  %220 = vmatprep.mubr.f32.mxu0 0.0
  %221 = vmatmul.mubr.f32.gmra.mrb[0].mxu0 %v68
  %v222 = vpop.f32.mrb[0].mxu0
  %v223 = vadd.f32 0.0, %v222
  %v224 = vpop.f32.mrb[0].mxu0
  %225 = vmatprep.mubr.f32.mxu0 0.0
  %226 = vmatmul.mubr.f32.gmra.mrb[0].mxu0 %v69
  %v227 = vpop.f32.mrb[0].mxu0
  %v228 = vadd.f32 0.0, %v227
  %v229 = vpop.f32.mrb[0].mxu0
  %230 = vdwg.mxu0
  %v231 = vadd.f32 %v38, %v153
  %v232 = vadd.f32 %v39, %v158
  %v233 = vadd.f32 %v40, %v163
  %v234 = vadd.f32 %v41, %v168
  %v235 = vadd.f32 %v42, %v173
  %v236 = vadd.f32 %v43, %v178
  %v237 = vadd.f32 %v44, %v183
  %v238 = vadd.f32 %v45, %v188
  %v239 = vadd.f32 %v46, %v193
  %v240 = vadd.f32 %v47, %v198
  %v241 = vadd.f32 %v48, %v203
  %v242 = vadd.f32 %v49, %v208
  %v243 = vadd.f32 %v50, %v213
  %v244 = vadd.f32 %v51, %v218
  %v245 = vadd.f32 %v52, %v223
  %v246 = vadd.f32 %v53, %v228
  %vm247 = vcmask 130048
  %248 = vst.msk [vmem:[#allocation2] sm:$0xff] %vm247, %v231
  %249 = vst.msk [vmem:[#allocation2 + $0x8] sm:$0xff] %vm247, %v232
  %250 = vst.msk [vmem:[#allocation2 + $0x10] sm:$0xff] %vm247, %v233
  %251 = vst.msk [vmem:[#allocation2 + $0x18] sm:$0xff] %vm247, %v234
  %252 = vst.msk [vmem:[#allocation2 + $0x20] sm:$0xff] %vm247, %v235
  %253 = vst.msk [vmem:[#allocation2 + $0x28] sm:$0xff] %vm247, %v236
  %254 = vst.msk [vmem:[#allocation2 + $0x30] sm:$0xff] %vm247, %v237
  %255 = vst.msk [vmem:[#allocation2 + $0x38] sm:$0xff] %vm247, %v238
  %256 = vst.msk [vmem:[#allocation2 + $0x40] sm:$0xff] %vm247, %v239
  %257 = vst.msk [vmem:[#allocation2 + $0x48] sm:$0xff] %vm247, %v240
  %258 = vst.msk [vmem:[#allocation2 + $0x50] sm:$0xff] %vm247, %v241
  %259 = vst.msk [vmem:[#allocation2 + $0x58] sm:$0xff] %vm247, %v242
  %260 = vst.msk [vmem:[#allocation2 + $0x60] sm:$0xff] %vm247, %v243
  %261 = vst.msk [vmem:[#allocation2 + $0x68] sm:$0xff] %vm247, %v244
  %262 = vst.msk [vmem:[#allocation2 + $0x70] sm:$0xff] %vm247, %v245
  %263 = vst.msk [vmem:[#allocation2 + $0x78] sm:$0xff] %vm247, %v246
  // Predicated region
  $region22: #{tpu_custom_call.1} parent=0 // pred_check
    %p264 = pneg %p17
  $region23: #{tpu_custom_call.1} parent=0 // pred_check_branch
    %266 = sbr.rel (%p264) target = $region25
  $region24: #{tpu_custom_call.1} parent=0 // pred_region
    %v267 = vld [vmem:[#allocation2] sm:$0xff]
    %v268 = vld [vmem:[#allocation2 + $0x8] sm:$0xff]
    %v269 = vld [vmem:[#allocation2 + $0x10] sm:$0xff]
    %v270 = vld [vmem:[#allocation2 + $0x18] sm:$0xff]
    %v271 = vld [vmem:[#allocation2 + $0x20] sm:$0xff]
    %v272 = vld [vmem:[#allocation2 + $0x28] sm:$0xff]
    %v273 = vld [vmem:[#allocation2 + $0x30] sm:$0xff]
    %v274 = vld [vmem:[#allocation2 + $0x38] sm:$0xff]
    %v275 = vld [vmem:[#allocation2 + $0x40] sm:$0xff]
    %v276 = vld [vmem:[#allocation2 + $0x48] sm:$0xff]
    %v277 = vld [vmem:[#allocation2 + $0x50] sm:$0xff]
    %v278 = vld [vmem:[#allocation2 + $0x58] sm:$0xff]
    %v279 = vld [vmem:[#allocation2 + $0x60] sm:$0xff]
    %v280 = vld [vmem:[#allocation2 + $0x68] sm:$0xff]
    %v281 = vld [vmem:[#allocation2 + $0x70] sm:$0xff]
    %v282 = vld [vmem:[#allocation2 + $0x78] sm:$0xff]
    %v283 = vld [vmem:[%s2] sm:$0x1]
    %v285 = vlaneseq
    %v286 = vshrl.u32 %v285, 7
    %v287 = vsub.s32 0, %v286
    %v288 = vrot.slane %v283, %v287
    %v290 = vadd.f32 %v267, %v288
    %v291 = vadd.f32 %v268, %v288
    %v292 = vadd.f32 %v269, %v288
    %v293 = vadd.f32 %v270, %v288
    %v294 = vadd.f32 %v271, %v288
    %v295 = vadd.f32 %v272, %v288
    %v296 = vadd.f32 %v273, %v288
    %v297 = vadd.f32 %v274, %v288
    %v298 = vadd.f32 %v275, %v288
    %v299 = vadd.f32 %v276, %v288
    %v300 = vadd.f32 %v277, %v288
    %v301 = vadd.f32 %v278, %v288
    %v302 = vadd.f32 %v279, %v288
    %v303 = vadd.f32 %v280, %v288
    %v304 = vadd.f32 %v281, %v288
    %v305 = vadd.f32 %v282, %v288
    %v306 = vmax.f32 %v290, 0.0
    %v307 = vmax.f32 %v291, 0.0
    %v308 = vmax.f32 %v292, 0.0
    %v309 = vmax.f32 %v293, 0.0
    %v310 = vmax.f32 %v294, 0.0
    %v311 = vmax.f32 %v295, 0.0
    %v312 = vmax.f32 %v296, 0.0
    %v313 = vmax.f32 %v297, 0.0
    %v314 = vmax.f32 %v298, 0.0
    %v315 = vmax.f32 %v299, 0.0
    %v316 = vmax.f32 %v300, 0.0
    %v317 = vmax.f32 %v301, 0.0
    %v318 = vmax.f32 %v302, 0.0
    %v319 = vmax.f32 %v303, 0.0
    %v320 = vmax.f32 %v304, 0.0
    %v321 = vmax.f32 %v305, 0.0
    %v322 = vld [vmem:[%s3] sm:$0xff]
    %v323 = vld [vmem:[%s3 + $0x8] sm:$0xff]
    %v325 = vsel %vm247, %v306, 0
    %v328 = vsel %vm247, %v307, 0
    %v331 = vsel %vm247, %v308, 0
    %v334 = vsel %vm247, %v309, 0
    %v337 = vsel %vm247, %v310, 0
    %v340 = vsel %vm247, %v311, 0
    %v343 = vsel %vm247, %v312, 0
    %v346 = vsel %vm247, %v313, 0
    %v349 = vsel %vm247, %v314, 0
    %v352 = vsel %vm247, %v315, 0
    %v355 = vsel %vm247, %v316, 0
    %v358 = vsel %vm247, %v317, 0
    %v361 = vsel %vm247, %v318, 0
    %v364 = vsel %vm247, %v319, 0
    %v367 = vsel %vm247, %v320, 0
    %v370 = vsel %vm247, %v321, 0
    %372 = vmatprep.subr.mxu0 0.0
    %373 = vmatpush1.msra.mxu0 %v322
    %374 = vmatprep.subr.mxu0 0.0
    %375 = vmatpush1.msra.mxu0 %v323
    %376 = vmatprep.subr.mxu0 0.0
    %377 = vmatpush1.msra.mxu0 0.0
    %378 = vmatprep.subr.mxu0 0.0
    %379 = vmatpush1.msra.mxu0 0.0
    %380 = vmatprep.subr.mxu0 0.0
    %381 = vmatpush1.msra.mxu0 0.0
    %382 = vmatprep.subr.mxu0 0.0
    %383 = vmatpush1.msra.mxu0 0.0
    %384 = vmatprep.subr.mxu0 0.0
    %385 = vmatpush1.msra.mxu0 0.0
    %386 = vmatprep.subr.mxu0 0.0
    %387 = vmatpush1.msra.mxu0 0.0
    %388 = vmatprep.subr.mxu0 0.0
    %389 = vmatpush1.msra.mxu0 0.0
    %390 = vmatprep.subr.mxu0 0.0
    %391 = vmatpush1.msra.mxu0 0.0
    %392 = vmatprep.subr.mxu0 0.0
    %393 = vmatpush1.msra.mxu0 0.0
    %394 = vmatprep.subr.mxu0 0.0
    %395 = vmatpush1.msra.mxu0 0.0
    %396 = vmatprep.subr.mxu0 0.0
    %397 = vmatpush1.msra.mxu0 0.0
    %398 = vmatprep.subr.mxu0 0.0
    %399 = vmatpush1.msra.mxu0 0.0
    %400 = vmatprep.subr.mxu0 0.0
    %401 = vmatpush1.msra.mxu0 0.0
    %402 = vmatprep.subr.mxu0 0.0
    %403 = vmatpush1.msra.mxu0 0.0
    %404 = vmatprep.subr.mxu0 0.0
    %405 = vmatpush1.msra.mxu0 0.0
    %406 = vmatprep.subr.mxu0 0.0
    %407 = vmatpush1.msra.mxu0 0.0
    %408 = vmatprep.subr.mxu0 0.0
    %409 = vmatpush1.msra.mxu0 0.0
    %410 = vmatprep.subr.mxu0 0.0
    %411 = vmatpush1.msra.mxu0 0.0
    %412 = vmatprep.subr.mxu0 0.0
    %413 = vmatpush1.msra.mxu0 0.0
    %414 = vmatprep.subr.mxu0 0.0
    %415 = vmatpush1.msra.mxu0 0.0
    %416 = vmatprep.subr.mxu0 0.0
    %417 = vmatpush1.msra.mxu0 0.0
    %418 = vmatprep.subr.mxu0 0.0
    %419 = vmatpush1.msra.mxu0 0.0
    %420 = vmatprep.subr.mxu0 0.0
    %421 = vmatpush1.msra.mxu0 0.0
    %422 = vmatprep.subr.mxu0 0.0
    %423 = vmatpush1.msra.mxu0 0.0
    %424 = vmatprep.subr.mxu0 0.0
    %425 = vmatpush1.msra.mxu0 0.0
    %426 = vmatprep.subr.mxu0 0.0
    %427 = vmatpush1.msra.mxu0 0.0
    %428 = vmatprep.subr.mxu0 0.0
    %429 = vmatpush1.msra.mxu0 0.0
    %430 = vmatprep.subr.mxu0 0.0
    %431 = vmatpush1.msra.mxu0 0.0
    %432 = vmatprep.subr.mxu0 0.0
    %433 = vmatpush1.msra.mxu0 0.0
    %434 = vmatprep.subr.mxu0 0.0
    %435 = vmatpush1.msra.mxu0 0.0
    %436 = vmatprep.mubr.f32.mxu0 0.0
    %437 = vmatmul.mubr.f32.gmra.mrb[0].mxu0 %v325
    %v438 = vpop.f32.mrb[0].mxu0
    %v439 = vadd.f32 0.0, %v438
    %v440 = vpop.f32.mrb[0].mxu0
    %441 = vmatprep.mubr.f32.mxu0 0.0
    %442 = vmatmul.mubr.f32.gmra.mrb[0].mxu0 %v328
    %v443 = vpop.f32.mrb[0].mxu0
    %v444 = vadd.f32 0.0, %v443
    %v445 = vpop.f32.mrb[0].mxu0
    %446 = vmatprep.mubr.f32.mxu0 0.0
    %447 = vmatmul.mubr.f32.gmra.mrb[0].mxu0 %v331
    %v448 = vpop.f32.mrb[0].mxu0
    %v449 = vadd.f32 0.0, %v448
    %v450 = vpop.f32.mrb[0].mxu0
    %451 = vmatprep.mubr.f32.mxu0 0.0
    %452 = vmatmul.mubr.f32.gmra.mrb[0].mxu0 %v334
    %v453 = vpop.f32.mrb[0].mxu0
    %v454 = vadd.f32 0.0, %v453
    %v455 = vpop.f32.mrb[0].mxu0
    %456 = vmatprep.mubr.f32.mxu0 0.0
    %457 = vmatmul.mubr.f32.gmra.mrb[0].mxu0 %v337
    %v458 = vpop.f32.mrb[0].mxu0
    %v459 = vadd.f32 0.0, %v458
    %v460 = vpop.f32.mrb[0].mxu0
    %461 = vmatprep.mubr.f32.mxu0 0.0
    %462 = vmatmul.mubr.f32.gmra.mrb[0].mxu0 %v340
    %v463 = vpop.f32.mrb[0].mxu0
    %v464 = vadd.f32 0.0, %v463
    %v465 = vpop.f32.mrb[0].mxu0
    %466 = vmatprep.mubr.f32.mxu0 0.0
    %467 = vmatmul.mubr.f32.gmra.mrb[0].mxu0 %v343
    %v468 = vpop.f32.mrb[0].mxu0
    %v469 = vadd.f32 0.0, %v468
    %v470 = vpop.f32.mrb[0].mxu0
    %471 = vmatprep.mubr.f32.mxu0 0.0
    %472 = vmatmul.mubr.f32.gmra.mrb[0].mxu0 %v346
    %v473 = vpop.f32.mrb[0].mxu0
    %v474 = vadd.f32 0.0, %v473
    %v475 = vpop.f32.mrb[0].mxu0
    %476 = vmatprep.mubr.f32.mxu0 0.0
    %477 = vmatmul.mubr.f32.gmra.mrb[0].mxu0 %v349
    %v478 = vpop.f32.mrb[0].mxu0
    %v479 = vadd.f32 0.0, %v478
    %v480 = vpop.f32.mrb[0].mxu0
    %481 = vmatprep.mubr.f32.mxu0 0.0
    %482 = vmatmul.mubr.f32.gmra.mrb[0].mxu0 %v352
    %v483 = vpop.f32.mrb[0].mxu0
    %v484 = vadd.f32 0.0, %v483
    %v485 = vpop.f32.mrb[0].mxu0
    %486 = vmatprep.mubr.f32.mxu0 0.0
    %487 = vmatmul.mubr.f32.gmra.mrb[0].mxu0 %v355
    %v488 = vpop.f32.mrb[0].mxu0
    %v489 = vadd.f32 0.0, %v488
    %v490 = vpop.f32.mrb[0].mxu0
    %491 = vmatprep.mubr.f32.mxu0 0.0
    %492 = vmatmul.mubr.f32.gmra.mrb[0].mxu0 %v358
    %v493 = vpop.f32.mrb[0].mxu0
    %v494 = vadd.f32 0.0, %v493
    %v495 = vpop.f32.mrb[0].mxu0
    %496 = vmatprep.mubr.f32.mxu0 0.0
    %497 = vmatmul.mubr.f32.gmra.mrb[0].mxu0 %v361
    %v498 = vpop.f32.mrb[0].mxu0
    %v499 = vadd.f32 0.0, %v498
    %v500 = vpop.f32.mrb[0].mxu0
    %501 = vmatprep.mubr.f32.mxu0 0.0
    %502 = vmatmul.mubr.f32.gmra.mrb[0].mxu0 %v364
    %v503 = vpop.f32.mrb[0].mxu0
    %v504 = vadd.f32 0.0, %v503
    %v505 = vpop.f32.mrb[0].mxu0
    %506 = vmatprep.mubr.f32.mxu0 0.0
    %507 = vmatmul.mubr.f32.gmra.mrb[0].mxu0 %v367
    %v508 = vpop.f32.mrb[0].mxu0
    %v509 = vadd.f32 0.0, %v508
    %v510 = vpop.f32.mrb[0].mxu0
    %511 = vmatprep.mubr.f32.mxu0 0.0
    %512 = vmatmul.mubr.f32.gmra.mrb[0].mxu0 %v370
    %v513 = vpop.f32.mrb[0].mxu0
    %v514 = vadd.f32 0.0, %v513
    %v515 = vpop.f32.mrb[0].mxu0
    %516 = vdwg.mxu0
    %vm517 = vcmask 261120
    %518 = vst.msk [vmem:[%s4] sm:$0xff] %vm517, %v439
    %519 = vst.msk [vmem:[%s4 + $0x8] sm:$0xff] %vm517, %v444
    %520 = vst.msk [vmem:[%s4 + $0x10] sm:$0xff] %vm517, %v449
    %521 = vst.msk [vmem:[%s4 + $0x18] sm:$0xff] %vm517, %v454
    %522 = vst.msk [vmem:[%s4 + $0x20] sm:$0xff] %vm517, %v459
    %523 = vst.msk [vmem:[%s4 + $0x28] sm:$0xff] %vm517, %v464
    %524 = vst.msk [vmem:[%s4 + $0x30] sm:$0xff] %vm517, %v469
    %525 = vst.msk [vmem:[%s4 + $0x38] sm:$0xff] %vm517, %v474
    %526 = vst.msk [vmem:[%s4 + $0x40] sm:$0xff] %vm517, %v479
    %527 = vst.msk [vmem:[%s4 + $0x48] sm:$0xff] %vm517, %v484
    %528 = vst.msk [vmem:[%s4 + $0x50] sm:$0xff] %vm517, %v489
    %529 = vst.msk [vmem:[%s4 + $0x58] sm:$0xff] %vm517, %v494
    %530 = vst.msk [vmem:[%s4 + $0x60] sm:$0xff] %vm517, %v499
    %531 = vst.msk [vmem:[%s4 + $0x68] sm:$0xff] %vm517, %v504
    %532 = vst.msk [vmem:[%s4 + $0x70] sm:$0xff] %vm517, %v509
    %533 = vst.msk [vmem:[%s4 + $0x78] sm:$0xff] %vm517, %v514
  $region25: #{tpu_custom_call.1} parent=0 // pred_fallthru
    _
  // Predicated region
  $region26: #{tpu_custom_call.1} parent=0 // pred_check
    _
  $region27: #{tpu_custom_call.1} parent=0 // pred_check_branch
    %535 = sbr.rel (0) target = $region29
  $region28: #{tpu_custom_call.1} parent=0 // pred_region
    _
  $region29: #{tpu_custom_call.1} parent=0 // pred_fallthru
    _
  // Predicated region
  $region30: #{tpu_custom_call.1} parent=0 // pred_check
    _
  $region31: #{tpu_custom_call.1} parent=0 // pred_check_branch
    %537 = sbr.rel (0) target = $region33
  $region32: #{tpu_custom_call.1} parent=0 // pred_region
    _
  $region33: #{tpu_custom_call.1} parent=0 // pred_fallthru
    _

</llo_original>
